<compile_context>
chip_gen: v7x
topology: tpu7x:2x2x1
jax: 0.10.0
libtpu: 0.0.40
codegen_flags: <defaults>
</compile_context>

<pallas_src>
import jax
import jax.numpy as jnp
from jax.experimental import pallas as pl
from jax.experimental.pallas import tpu as pltpu


def _round_up(x, m):
    return ((x + m - 1) // m) * m


def _device_kind():
    try:
        return jax.devices()[0].device_kind.lower()
    except Exception:
        return ""


def _vmem_capacity_bytes():
    try:
        cap = getattr(pltpu.get_tpu_info(), "vmem_capacity_bytes", None)
        if cap:
            return int(cap)
    except Exception:
        pass
    kind = _device_kind()
    if "v7" in kind or "7x" in kind:
        return 64 << 20
    return 128 << 20


def _make_flce_kernel(*, tile_bt, tile_v, v_true, ignore_index, label_smoothing,
                      has_bias, need_col_mask, flip, compute_dtype):
    use_smooth = float(label_smoothing) != 0.0

    def kernel(*refs):
        it = iter(refs)
        x_ref = next(it)
        w_ref = next(it)                      # (tile_v, H) slice of (V, H) weight
        b_ref = next(it) if has_bias else None
        tgt_ref = next(it)
        loss_ref = next(it)
        m_sc = next(it)
        l_sc = next(it)
        t_sc = next(it)
        s_sc = next(it) if use_smooth else None

        if flip:
            # Grid = (vocab outer, rows inner): weight streamed from HBM once;
            # per-row accumulators persist in a (BT_pad, 1) scratch slice.
            j = pl.program_id(0)
            nv = pl.num_programs(0)
            row0 = pl.multiple_of(pl.program_id(1) * tile_bt, tile_bt)

            def rd(ref):
                return ref[pl.ds(row0, tile_bt), :]

            def wr(ref, val):
                ref[pl.ds(row0, tile_bt), :] = val
        else:
            # Grid = (rows parallel, vocab inner): x tile resident over vocab.
            j = pl.program_id(1)
            nv = pl.num_programs(1)

            def rd(ref):
                return ref[...]

            def wr(ref, val):
                ref[...] = val

        @pl.when(j == 0)
        def _():
            wr(m_sc, jnp.full((tile_bt, 1), -jnp.inf, jnp.float32))
            wr(l_sc, jnp.zeros((tile_bt, 1), jnp.float32))
            wr(t_sc, jnp.zeros((tile_bt, 1), jnp.float32))
            if use_smooth:
                wr(s_sc, jnp.zeros((tile_bt, 1), jnp.float32))

        # (tile_bt, H) x (tile_v, H) contracted on H: the MXU consumes the
        # weight tile in its natural (V, H) layout; f32 accumulation.
        xv = x_ref[...]
        wv = w_ref[...]
        if xv.dtype != compute_dtype:
            xv = xv.astype(compute_dtype)     # per-tile VMEM cast only
        if wv.dtype != compute_dtype:
            wv = wv.astype(compute_dtype)
        logits = jax.lax.dot_general(
            xv, wv, dimension_numbers=(((1,), (1,)), ((), ())),
            preferred_element_type=jnp.float32)
        if has_bias:
            logits = logits + b_ref[...]      # (1, tile_v) broadcasts

        tgt = tgt_ref[...]                    # (tile_bt, 1) int32
        # Local column index compared against (tgt - j*tile_v): avoids a
        # full-tile int add of the global offset every step.
        col = jax.lax.broadcasted_iota(jnp.int32, (tile_bt, tile_v), 1)
        onehot = col == (tgt - j * tile_v)

        def accumulate(masked):
            if masked:
                valid_col = col < (v_true - j * tile_v)
                lse_logits = jnp.where(valid_col, logits, -jnp.inf)
            else:
                lse_logits = logits
            # target logit via one-hot gather (masked / padded cols never match)
            wr(t_sc, rd(t_sc) + jnp.sum(jnp.where(onehot, logits, 0.0),
                                        axis=-1, keepdims=True))
            if use_smooth:
                sm = jnp.where(valid_col, logits, 0.0) if masked else logits
                wr(s_sc, rd(s_sc) + jnp.sum(sm, axis=-1, keepdims=True))
            # online log-sum-exp (masked cols contribute exp(-inf) = 0)
            m_old = rd(m_sc)
            m_new = jnp.maximum(m_old, jnp.max(lse_logits, axis=-1, keepdims=True))
            wr(l_sc, rd(l_sc) * jnp.exp(m_old - m_new)
               + jnp.sum(jnp.exp(lse_logits - m_new), axis=-1, keepdims=True))
            wr(m_sc, m_new)

        if need_col_mask:
            # Only the final vocab tile has invalid columns; every other step
            # runs the cheap unmasked path (saves 2-3 VPU passes / step).
            @pl.when(j != nv - 1)
            def _():
                accumulate(masked=False)

            @pl.when(j == nv - 1)
            def _():
                accumulate(masked=True)
        else:
            accumulate(masked=False)

        @pl.when(j == nv - 1)
        def _():
            lse = rd(m_sc) + jnp.log(rd(l_sc))
            nll = lse - rd(t_sc)
            if use_smooth:
                row_loss = ((1.0 - label_smoothing) * nll
                            + label_smoothing * (lse - rd(s_sc) / float(v_true)))
            else:
                row_loss = nll
            loss_ref[...] = jnp.where(tgt != ignore_index, row_loss, 0.0)

    return kernel


def fused_linear_cross_entropy_loss(_input, weight, target, bias=None,
                                    ignore_index=-100, label_smoothing=0.0,
                                    reduction="mean",
                                    _tile_bt=None, _tile_v=None):
    """Forward of FusedLinearCrossEntropyLoss: returns a scalar f32 loss."""
    H = _input.shape[-1]
    x = _input.reshape(-1, H)
    tgt = target.reshape(-1).astype(jnp.int32)
    BT = x.shape[0]
    V = weight.shape[0]

    has_bias = bias is not None
    use_smooth = float(label_smoothing) != 0.0
    n_acc = 4 if use_smooth else 3
    x_item = jnp.dtype(x.dtype).itemsize
    w_item = jnp.dtype(weight.dtype).itemsize
    compute_dtype = jnp.promote_types(x.dtype, weight.dtype)

    # ---- per-generation tile / VMEM budgets --------------------------------
    vmem_cap = _vmem_capacity_bytes()
    kind = _device_kind()
    if vmem_cap >= (100 << 20):
        budget, vmem_limit = 96 << 20, 110 << 20          # v5e / v6e (128 MiB)
        tile_bt_target = 384 if "v5" in kind else 1024    # v5e knee ~240, v6e ~640
    else:
        budget, vmem_limit = 44 << 20, 56 << 20           # v7x (64 MiB / TC)
        tile_bt_target = 512                              # knee ~310 flop/byte
    tile_v_target = 1024

    sub = max(8, 32 // x_item)                 # sublane packing: 8/16/32
    tile_bt = tile_bt_target if BT >= tile_bt_target else _round_up(max(BT, 1), sub)
    if V <= 128:
        tile_v = V
    else:
        tile_v = min(tile_v_target, (V // 128) * 128)

    def est_vmem(tb, tv, acc_rows):
        return (2 * tb * H * x_item                       # x tile (dbl-buffered)
                + 2 * tv * H * w_item                     # weight tile
                + (2 * tv * 4 if has_bias else 0)
                + 2 * tb * 4                              # target tile
                + 4 * tb * tv * 4                         # f32 full-tile temporaries
                + n_acc * (_round_up(acc_rows, 8) // 8) * 4096
                + (2 << 20))                              # headroom

    while est_vmem(tile_bt, tile_v, tile_bt) > budget and tile_v > 128:
        tile_v = max(128, ((tile_v // 2) // 128) * 128)
    while est_vmem(tile_bt, tile_v, tile_bt) > budget and tile_bt > sub:
        tile_bt = max(sub, _round_up(tile_bt // 2, sub))

    if _tile_bt is not None:
        tile_bt = int(_tile_bt)
    if _tile_v is not None:
        tile_v = int(_tile_v)

    grid_v = -(-V // tile_v)
    need_col_mask = (grid_v * tile_v != V)     # partial last tile, never padded

    BT_pad = _round_up(BT, tile_bt)
    if BT_pad != BT:
        x = jnp.pad(x, ((0, BT_pad - BT), (0, 0)))
        tgt_pad = jnp.pad(tgt, (0, BT_pad - BT), constant_values=ignore_index)
    else:
        tgt_pad = tgt
    tgt2d = tgt_pad.reshape(BT_pad, 1)
    grid_r = BT_pad // tile_bt

    # Flip the grid (vocab outer) when it reduces total HBM traffic and the
    # persistent per-row accumulators still fit the VMEM budget.
    weight_stream = V * H * w_item
    x_stream = BT_pad * H * x_item
    flip = (grid_r > 1
            and weight_stream + x_stream * grid_v < weight_stream * grid_r + x_stream
            and est_vmem(tile_bt, tile_v, BT_pad) <= budget)
    acc_rows = BT_pad if flip else tile_bt

    if flip:
        grid = (grid_v, grid_r)
        row_map = lambda j, i: (i, 0)
        voc_map = lambda j, i: (j, 0)
        bias_map = lambda j, i: (0, j)
        dims = ("arbitrary", "arbitrary")
    else:
        grid = (grid_r, grid_v)
        row_map = lambda i, j: (i, 0)
        voc_map = lambda i, j: (j, 0)
        bias_map = lambda i, j: (0, j)
        dims = ("parallel", "arbitrary")

    in_specs = [
        pl.BlockSpec((tile_bt, H), row_map),   # x
        pl.BlockSpec((tile_v, H), voc_map),    # weight, natural (V, H) layout
    ]
    inputs = [x, weight]
    if has_bias:
        in_specs.append(pl.BlockSpec((1, tile_v), bias_map))
        inputs.append(bias.astype(jnp.float32).reshape(1, V))
    in_specs.append(pl.BlockSpec((tile_bt, 1), row_map))
    inputs.append(tgt2d)

    scratch_shapes = [pltpu.VMEM((acc_rows, 1), jnp.float32)] * n_acc

    kernel = _make_flce_kernel(
        tile_bt=tile_bt, tile_v=tile_v, v_true=V, ignore_index=ignore_index,
        label_smoothing=float(label_smoothing), has_bias=has_bias,
        need_col_mask=need_col_mask, flip=flip, compute_dtype=compute_dtype)

    loss_rows = pl.pallas_call(
        kernel,
        out_shape=jax.ShapeDtypeStruct((BT_pad, 1), jnp.float32),
        grid_spec=pltpu.PrefetchScalarGridSpec(
            num_scalar_prefetch=0,
            grid=grid,
            in_specs=in_specs,
            out_specs=pl.BlockSpec((tile_bt, 1), row_map),
            scratch_shapes=scratch_shapes,
        ),
        compiler_params=pltpu.CompilerParams(
            dimension_semantics=dims,
            vmem_limit_bytes=int(vmem_limit)),
    )(*inputs)

    total = jnp.sum(loss_rows)
    n_non_ignore = jnp.sum((tgt != ignore_index).astype(jnp.float32))
    if reduction == "mean":
        return jnp.where(n_non_ignore > 0,
                         total / jnp.maximum(n_non_ignore, 1.0), 0.0)
    elif reduction == "sum":
        return total
    else:
        # TODO(synk): reduction='none' would need the per-row vector returned;
        # the reference module still sums loss_1d, so we match that here.
        return total


def _reference_loss(x, w, tgt, b, ignore_index, label_smoothing, reduction):
    logits = (x.astype(jnp.float32) @ w.astype(jnp.float32).T
              + b.astype(jnp.float32))
    lse = jax.scipy.special.logsumexp(logits, axis=-1)
    safe_tgt = jnp.where(tgt == ignore_index, 0, tgt)
    tgt_logit = jnp.take_along_axis(logits, safe_tgt[:, None], axis=-1)[:, 0]
    nll = lse - tgt_logit
    smooth = label_smoothing * (lse - jnp.mean(logits, axis=-1))
    row = (1.0 - label_smoothing) * nll + smooth
    row = jnp.where(tgt == ignore_index, 0.0, row)
    n = jnp.sum((tgt != ignore_index).astype(jnp.float32))
    if reduction == "mean":
        return jnp.where(n > 0, jnp.sum(row) / jnp.maximum(n, 1.0), 0.0)
    return jnp.sum(row)


if __name__ == "__main__":
    B, T, H, V = 2, 8, 32, 256
    key = jax.random.PRNGKey(0)
    kx, kw, kb, kt = jax.random.split(key, 4)

    x = jax.random.normal(kx, (B, T, H), dtype=jnp.float32)
    weight = jax.random.normal(kw, (V, H), dtype=jnp.float32) * 0.05
    bias = jax.random.normal(kb, (V,), dtype=jnp.float32) * 0.01
    target = jax.random.randint(kt, (B, T), 0, V, dtype=jnp.int32)
    target = target.at[0, 0].set(-100).at[1, 3].set(-100)   # some ignored rows

    # Case 1: bias, no smoothing, mean reduction (single vocab tile, no mask).
    loss1 = fused_linear_cross_entropy_loss(
        x, weight, target, bias,
        ignore_index=-100, label_smoothing=0.0, reduction="mean")
    loss1 = jax.block_until_ready(loss1)
    ref1 = _reference_loss(x.reshape(-1, H), weight, target.reshape(-1), bias,
                           -100, 0.0, "mean")
    assert jnp.allclose(loss1, ref1, rtol=1e-5, atol=1e-5), (loss1, ref1)

    # Case 2: odd vocab (partial last weight block + column mask), no bias,
    # label smoothing, sum reduction, multi vocab-tile grid.
    V2 = 250
    w2 = weight[:V2]
    t2 = jnp.clip(target, -100, V2 - 1)
    loss2 = fused_linear_cross_entropy_loss(
        x, w2, t2, None,
        ignore_index=-100, label_smoothing=0.1, reduction="sum")
    loss2 = jax.block_until_ready(loss2)
    ref2 = _reference_loss(x.reshape(-1, H), w2, t2.reshape(-1),
                           jnp.zeros((V2,), jnp.float32), -100, 0.1, "sum")
    assert jnp.allclose(loss2, ref2, rtol=1e-5, atol=1e-5), (loss2, ref2)

    # Case 3: flipped grid (multiple row tiles, weight streamed once), with
    # bias, smoothing, column mask and ignored rows.
    B3 = 4
    x3 = jax.random.normal(jax.random.PRNGKey(1), (B3, T, H), dtype=jnp.float32)
    t3 = jax.random.randint(jax.random.PRNGKey(2), (B3, T), 0, V2, dtype=jnp.int32)
    t3 = t3.at[0, 0].set(-100).at[3, 5].set(-100)
    b3 = bias[:V2]
    loss3 = fused_linear_cross_entropy_loss(
        x3, w2, t3, b3,
        ignore_index=-100, label_smoothing=0.05, reduction="mean",
        _tile_bt=16, _tile_v=128)
    loss3 = jax.block_until_ready(loss3)
    ref3 = _reference_loss(x3.reshape(-1, H), w2, t3.reshape(-1), b3,
                           -100, 0.05, "mean")
    assert jnp.allclose(loss3, ref3, rtol=1e-5, atol=1e-5), (loss3, ref3)

    # Case 4: bf16 inputs (exercises the 16-row sublane rounding and the
    # in-kernel dtype handling; MXU still accumulates in f32).
    xb = x.astype(jnp.bfloat16)
    wb = weight.astype(jnp.bfloat16)
    loss4 = fused_linear_cross_entropy_loss(
        xb, wb, target, bias,
        ignore_index=-100, label_smoothing=0.0, reduction="mean")
    loss4 = jax.block_until_ready(loss4)
    ref4 = _reference_loss(xb.reshape(-1, H), wb, target.reshape(-1), bias,
                           -100, 0.0, "mean")
    assert jnp.allclose(loss4, ref4, rtol=2e-2, atol=2e-2), (loss4, ref4)

    print("KERNEL_OK")
</pallas_src>

<mosaic_0001>
module attributes {stable_mosaic.version = 11 : i64} {
  func.func @kernel(%arg0: i32, %arg1: i32, %arg2: memref<16x32xf32, #tpu.memory_space<vmem>>, %arg3: memref<256x32xf32, #tpu.memory_space<vmem>>, %arg4: memref<1x256xf32, #tpu.memory_space<vmem>>, %arg5: memref<16x1xi32, #tpu.memory_space<vmem>>, %arg6: memref<16x1xf32, #tpu.memory_space<vmem>>, %arg7: memref<16x1xf32, #tpu.memory_space<vmem>>, %arg8: memref<16x1xf32, #tpu.memory_space<vmem>>, %arg9: memref<16x1xf32, #tpu.memory_space<vmem>>) attributes {dimension_semantics = [#tpu.dimension_semantics<parallel>, #tpu.dimension_semantics<arbitrary>], iteration_bounds = array<i64: 1, 1>, scalar_prefetch = 0 : i64, scratch_operands = 3 : i64, tpu.core_type = #tpu.core_type<tc>, window_params = [{transform_indices = @transform_0, window_bounds = array<i64: 16, 32>}, {transform_indices = @transform_1, window_bounds = array<i64: 256, 32>}, {transform_indices = @transform_2, window_bounds = array<i64: 1, 256>}, {transform_indices = @transform_3, window_bounds = array<i64: 16, 1>}, {transform_indices = @transform_4, window_bounds = array<i64: 16, 1>}]} {
    %c0_i32 = arith.constant 0 : i32
    %0 = arith.cmpi eq, %arg1, %c0_i32 : i32
    %1 = arith.extui %0 : i1 to i32
    %c0_i32_0 = arith.constant 0 : i32
    %2 = arith.cmpi ne, %1, %c0_i32_0 : i32
    scf.if %2 {
      %cst_26 = arith.constant 0xFF800000 : f32
      %42 = vector.broadcast %cst_26 : f32 to vector<16x1xf32>
      %c0_27 = arith.constant 0 : index
      %c0_28 = arith.constant 0 : index
      %43 = vector.load %arg7[%c0_27, %c0_28] : memref<16x1xf32, #tpu.memory_space<vmem>>, vector<16x1xf32>
      tpu.vector_store %arg7[%c0_27, %c0_28], %42 {strides = array<i32>} : memref<16x1xf32, #tpu.memory_space<vmem>>, vector<16x1xf32>,
      %cst_29 = arith.constant 0.000000e+00 : f32
      %44 = vector.broadcast %cst_29 : f32 to vector<16x1xf32>
      %c0_30 = arith.constant 0 : index
      %c0_31 = arith.constant 0 : index
      %45 = vector.load %arg8[%c0_30, %c0_31] : memref<16x1xf32, #tpu.memory_space<vmem>>, vector<16x1xf32>
      tpu.vector_store %arg8[%c0_30, %c0_31], %44 {strides = array<i32>} : memref<16x1xf32, #tpu.memory_space<vmem>>, vector<16x1xf32>,
      %cst_32 = arith.constant 0.000000e+00 : f32
      %46 = vector.broadcast %cst_32 : f32 to vector<16x1xf32>
      %c0_33 = arith.constant 0 : index
      %c0_34 = arith.constant 0 : index
      %47 = vector.load %arg9[%c0_33, %c0_34] : memref<16x1xf32, #tpu.memory_space<vmem>>, vector<16x1xf32>
      tpu.vector_store %arg9[%c0_33, %c0_34], %46 {strides = array<i32>} : memref<16x1xf32, #tpu.memory_space<vmem>>, vector<16x1xf32>,
    } else {
    }
    %c0 = arith.constant 0 : index
    %c0_1 = arith.constant 0 : index
    %3 = vector.load %arg2[%c0, %c0_1] : memref<16x32xf32, #tpu.memory_space<vmem>>, vector<16x32xf32>
    %c0_2 = arith.constant 0 : index
    %c0_3 = arith.constant 0 : index
    %4 = vector.load %arg3[%c0_2, %c0_3] : memref<256x32xf32, #tpu.memory_space<vmem>>, vector<256x32xf32>
    %cst = arith.constant dense<0.000000e+00> : vector<16x256xf32>
    %5 = tpu.matmul %3, %4, %cst {dimension_numbers = #tpu.dot_dimension_numbers<[1], [1], [0], [0], [0, 0, 1, 0], [], []>} : vector<16x32xf32>, vector<256x32xf32>, vector<16x256xf32> -> vector<16x256xf32>
    %c0_4 = arith.constant 0 : index
    %c0_5 = arith.constant 0 : index
    %6 = vector.load %arg4[%c0_4, %c0_5] : memref<1x256xf32, #tpu.memory_space<vmem>>, vector<1x256xf32>
    %7 = vector.broadcast %6 : vector<1x256xf32> to vector<16x256xf32>
    %8 = arith.addf %5, %7 : vector<16x256xf32>
    %c0_6 = arith.constant 0 : index
    %c0_7 = arith.constant 0 : index
    %9 = vector.load %arg5[%c0_6, %c0_7] : memref<16x1xi32, #tpu.memory_space<vmem>>, vector<16x1xi32>
    %10 = tpu.iota {dimensions = array<i32: 1>} : vector<16x256xi32>
    %c256_i32 = arith.constant 256 : i32
    %11 = arith.muli %arg1, %c256_i32 : i32
    %12 = vector.broadcast %11 : i32 to vector<16x1xi32>
    %13 = arith.subi %9, %12 : vector<16x1xi32>
    %14 = vector.broadcast %13 : vector<16x1xi32> to vector<16x256xi32>
    %15 = arith.cmpi eq, %10, %14 : vector<16x256xi32>
    %c0_8 = arith.constant 0 : index
    %c0_9 = arith.constant 0 : index
    %16 = vector.load %arg9[%c0_8, %c0_9] : memref<16x1xf32, #tpu.memory_space<vmem>>, vector<16x1xf32>
    %cst_10 = arith.constant 0.000000e+00 : f32
    %17 = vector.broadcast %cst_10 : f32 to vector<16x256xf32>
    %18 = arith.select %15, %8, %17 : vector<16x256xi1>, vector<16x256xf32>
    %cst_11 = arith.constant dense<0.000000e+00> : vector<16xf32>
    %19 = vector.multi_reduction <add>, %18, %cst_11 [1] : vector<16x256xf32> to vector<16xf32>
    %20 = vector.shape_cast %19 : vector<16xf32> to vector<16x1xf32>
    %21 = arith.addf %16, %20 : vector<16x1xf32>
    %c0_12 = arith.constant 0 : index
    %c0_13 = arith.constant 0 : index
    %22 = vector.load %arg9[%c0_12, %c0_13] : memref<16x1xf32, #tpu.memory_space<vmem>>, vector<16x1xf32>
    tpu.vector_store %arg9[%c0_12, %c0_13], %21 {strides = array<i32>} : memref<16x1xf32, #tpu.memory_space<vmem>>, vector<16x1xf32>,
    %c0_14 = arith.constant 0 : index
    %c0_15 = arith.constant 0 : index
    %23 = vector.load %arg7[%c0_14, %c0_15] : memref<16x1xf32, #tpu.memory_space<vmem>>, vector<16x1xf32>
    %cst_16 = arith.constant dense<0xFF800000> : vector<16xf32>
    %24 = vector.multi_reduction <maximumf>, %8, %cst_16 [1] : vector<16x256xf32> to vector<16xf32>
    %25 = vector.shape_cast %24 : vector<16xf32> to vector<16x1xf32>
    %26 = arith.maximumf %23, %25 : vector<16x1xf32>
    %c0_17 = arith.constant 0 : index
    %c0_18 = arith.constant 0 : index
    %27 = vector.load %arg8[%c0_17, %c0_18] : memref<16x1xf32, #tpu.memory_space<vmem>>, vector<16x1xf32>
    %28 = arith.subf %23, %26 : vector<16x1xf32>
    %29 = math.exp %28 : vector<16x1xf32>
    %30 = arith.mulf %27, %29 : vector<16x1xf32>
    %31 = vector.broadcast %26 : vector<16x1xf32> to vector<16x256xf32>
    %32 = arith.subf %8, %31 : vector<16x256xf32>
    %33 = math.exp %32 : vector<16x256xf32>
    %cst_19 = arith.constant dense<0.000000e+00> : vector<16xf32>
    %34 = vector.multi_reduction <add>, %33, %cst_19 [1] : vector<16x256xf32> to vector<16xf32>
    %35 = vector.shape_cast %34 : vector<16xf32> to vector<16x1xf32>
    %36 = arith.addf %30, %35 : vector<16x1xf32>
    %c0_20 = arith.constant 0 : index
    %c0_21 = arith.constant 0 : index
    %37 = vector.load %arg8[%c0_20, %c0_21] : memref<16x1xf32, #tpu.memory_space<vmem>>, vector<16x1xf32>
    tpu.vector_store %arg8[%c0_20, %c0_21], %36 {strides = array<i32>} : memref<16x1xf32, #tpu.memory_space<vmem>>, vector<16x1xf32>,
    %c0_22 = arith.constant 0 : index
    %c0_23 = arith.constant 0 : index
    %38 = vector.load %arg7[%c0_22, %c0_23] : memref<16x1xf32, #tpu.memory_space<vmem>>, vector<16x1xf32>
    tpu.vector_store %arg7[%c0_22, %c0_23], %26 {strides = array<i32>} : memref<16x1xf32, #tpu.memory_space<vmem>>, vector<16x1xf32>,
    %c0_i32_24 = arith.constant 0 : i32
    %39 = arith.cmpi eq, %arg1, %c0_i32_24 : i32
    %40 = arith.extui %39 : i1 to i32
    %c0_i32_25 = arith.constant 0 : i32
    %41 = arith.cmpi ne, %40, %c0_i32_25 : i32
    scf.if %41 {
      %c0_26 = arith.constant 0 : index
      %c0_27 = arith.constant 0 : index
      %42 = vector.load %arg7[%c0_26, %c0_27] : memref<16x1xf32, #tpu.memory_space<vmem>>, vector<16x1xf32>
      %c0_28 = arith.constant 0 : index
      %c0_29 = arith.constant 0 : index
      %43 = vector.load %arg8[%c0_28, %c0_29] : memref<16x1xf32, #tpu.memory_space<vmem>>, vector<16x1xf32>
      %44 = math.log %43 : vector<16x1xf32>
      %45 = arith.addf %42, %44 : vector<16x1xf32>
      %c0_30 = arith.constant 0 : index
      %c0_31 = arith.constant 0 : index
      %46 = vector.load %arg9[%c0_30, %c0_31] : memref<16x1xf32, #tpu.memory_space<vmem>>, vector<16x1xf32>
      %47 = arith.subf %45, %46 : vector<16x1xf32>
      %c-100_i32 = arith.constant -100 : i32
      %48 = vector.broadcast %c-100_i32 : i32 to vector<16x1xi32>
      %49 = arith.cmpi ne, %9, %48 : vector<16x1xi32>
      %cst_32 = arith.constant 0.000000e+00 : f32
      %50 = vector.broadcast %cst_32 : f32 to vector<16x1xf32>
      %51 = arith.select %49, %47, %50 : vector<16x1xi1>, vector<16x1xf32>
      %c0_33 = arith.constant 0 : index
      %c0_34 = arith.constant 0 : index
      %52 = vector.load %arg6[%c0_33, %c0_34] : memref<16x1xf32, #tpu.memory_space<vmem>>, vector<16x1xf32>
      tpu.vector_store %arg6[%c0_33, %c0_34], %51 {strides = array<i32>} : memref<16x1xf32, #tpu.memory_space<vmem>>, vector<16x1xf32>,
    } else {
    }
    return
  }
  func.func @transform_0(%arg0: i32, %arg1: i32) -> (i32, i32) {
    %c0_i32 = arith.constant 0 : i32
    %c0_i32_0 = arith.constant 0 : i32
    return %arg0, %c0_i32 : i32, i32
  }
  func.func @transform_1(%arg0: i32, %arg1: i32) -> (i32, i32) {
    %c0_i32 = arith.constant 0 : i32
    %c0_i32_0 = arith.constant 0 : i32
    return %arg1, %c0_i32 : i32, i32
  }
  func.func @transform_2(%arg0: i32, %arg1: i32) -> (i32, i32) {
    %c0_i32 = arith.constant 0 : i32
    %c0_i32_0 = arith.constant 0 : i32
    return %c0_i32, %arg1 : i32, i32
  }
  func.func @transform_3(%arg0: i32, %arg1: i32) -> (i32, i32) {
    %c0_i32 = arith.constant 0 : i32
    %c0_i32_0 = arith.constant 0 : i32
    return %arg0, %c0_i32 : i32, i32
  }
  func.func @transform_4(%arg0: i32, %arg1: i32) -> (i32, i32) {
    %c0_i32 = arith.constant 0 : i32
    %c0_i32_0 = arith.constant 0 : i32
    return %arg0, %c0_i32 : i32, i32
  }
}

</mosaic_0001>

<llo_original>
// kernel: tpu_custom_call.1
$region0: #{tpu_custom_call.1}
  #allocation0 [shape = 'u32[]', space=smem, size = 0x4, offset = 0x4, fixed_abs, tag = 'smem constant byte address 0x4 - core index']
  #allocation1 [shape = 'u32[144,128]{1,0:T(1,128)}', space=vmem, size = 0x12000, scoped, tag = 'internal scratch']
  #allocation2 [shape = 'f32[16,1]{1,0:T(8,128)}', space=vmem, size = 0x2000, scoped, tag = 'scratch operand']
  #allocation3 [shape = 'f32[16,1]{1,0:T(8,128)}', space=vmem, size = 0x2000, scoped, tag = 'scratch operand']
  #allocation4 [shape = 'f32[16,1]{1,0:T(8,128)}', space=vmem, size = 0x2000, scoped, tag = 'scratch operand']
  %s0 = inlined_call_operand.hbm [shape: f32[16,32], index: 0, kind: input, shape index: {}]
  %s1 = inlined_call_operand.hbm [shape: f32[256,32], index: 1, kind: input, shape index: {}]
  %s2 = inlined_call_operand.hbm [shape: f32[1,256], index: 2, kind: input, shape index: {}]
  %s3 = inlined_call_operand.hbm [shape: s32[16,1], index: 3, kind: input, shape index: {}]
  %s4 = inlined_call_operand.hbm [shape: f32[16,1], index: 4, kind: output, shape index: {}]
  %s5 = sld [smem:[#allocation0]]
  $region50: #{tpu_custom_call.1} parent=0
    _
  %s7 = ssub.s32 1, %s5
  %s8 = scalar_select 0, %s7, %s5
  $region1: #{tpu_custom_call.1} parent=0
    #allocation5 [shape = 'u8[8192]{0}', space=vmem, size = 0x2000, scoped, tag = 'input window, operand 0, single buffered']
    #allocation6 [shape = 's32[1]{0}', space=sflag, size = 0x4, scoped, tag = 'scoped memory for tpu_custom_call.1']
    #allocation7 [shape = 's32[1]{0}', space=sflag, size = 0x4, scoped, tag = 'scoped memory for tpu_custom_call.1']
    #allocation8 [shape = 'u8[131072]{0}', space=vmem, size = 0x20000, scoped, tag = 'input window, operand 1, single buffered']
    #allocation9 [shape = 's32[1]{0}', space=sflag, size = 0x4, scoped, tag = 'scoped memory for tpu_custom_call.1']
    #allocation10 [shape = 'u8[1024]{0}', space=vmem, size = 0x400, scoped, tag = 'input window, operand 2, single buffered']
    #allocation11 [shape = 'u8[8192]{0}', space=vmem, size = 0x2000, scoped, tag = 'input window, operand 3, single buffered']
    #allocation12 [shape = 's32[1]{0}', space=sflag, size = 0x4, scoped, tag = 'scoped memory for tpu_custom_call.1']
    #allocation13 [shape = 'u8[8192]{0}', space=vmem, size = 0x2000, scoped, tag = 'output window, operand 0, single buffered']
    %9 = vsyncpa [#allocation6], 0
    %10 = vsyncpa [#allocation9], 0
    %11 = vsyncpa [#allocation12], 0
    %12 = vsyncpa [#allocation7], 0
    // Predicated region
    $region2: #{tpu_custom_call.1} parent=1 // pred_check
      _
    $region3: #{tpu_custom_call.1} parent=1 // pred_check_branch
      %14 = sbr.rel (0) target = $region5
    $region4: #{tpu_custom_call.1} parent=1 // pred_region
      %s16 = ssub.s32 256, 256
      %17 = vsyncadd [#allocation6], %s16
      %s18 = sshll.u32 [#allocation5], 4
      %s19 = int_to_ptr.vmem [resolvable:$true] %s18
      %24 = dma.hbm_to_vmem [thread:$0]  %s0, 256, %s19, [#allocation6], 128, 128, 8
    $region5: #{tpu_custom_call.1} parent=1 // pred_fallthru
      _
    // Predicated region
    $region6: #{tpu_custom_call.1} parent=1 // pred_check
      _
    $region7: #{tpu_custom_call.1} parent=1 // pred_check_branch
      %26 = sbr.rel (0) target = $region9
    $region8: #{tpu_custom_call.1} parent=1 // pred_region
      %s28 = ssub.s32 4096, 4096
      %29 = vsyncadd [#allocation9], %s28
      %s30 = sshll.u32 [#allocation8], 4
      %s31 = int_to_ptr.vmem [resolvable:$true] %s30
      %36 = dma.hbm_to_vmem [thread:$0]  %s1, 4096, %s31, [#allocation9], 128, 128, 8
    $region9: #{tpu_custom_call.1} parent=1 // pred_fallthru
      _
    // Predicated region
    $region10: #{tpu_custom_call.1} parent=1 // pred_check
      _
    $region11: #{tpu_custom_call.1} parent=1 // pred_check_branch
      %38 = sbr.rel (0) target = $region13
    $region12: #{tpu_custom_call.1} parent=1 // pred_region
      %s40 = ssub.s32 32, 32
      %41 = vsyncadd [#allocation9], %s40
      %s43 = sshll.u32 [#allocation10], 4
      %s44 = int_to_ptr.vmem [resolvable:$true] %s43
      %46 = dma.hbm_to_vmem [thread:$0]  %s2, 32, %s44, [#allocation9]
    $region13: #{tpu_custom_call.1} parent=1 // pred_fallthru
      _
    // Predicated region
    $region14: #{tpu_custom_call.1} parent=1 // pred_check
      _
    $region15: #{tpu_custom_call.1} parent=1 // pred_check_branch
      %48 = sbr.rel (0) target = $region17
    $region16: #{tpu_custom_call.1} parent=1 // pred_region
      %s50 = ssub.s32 256, 256
      %51 = vsyncadd [#allocation12], %s50
      %s52 = sshll.u32 [#allocation11], 4
      %s53 = int_to_ptr.vmem [resolvable:$true] %s52
      %58 = dma.hbm_to_vmem [thread:$0]  %s3, 256, %s53, [#allocation12], 128, 128, 8
    $region17: #{tpu_custom_call.1} parent=1 // pred_fallthru
      _
    // Predicated region
    $region18: #{tpu_custom_call.1} parent=1 // pred_check
      _
    $region19: #{tpu_custom_call.1} parent=1 // pred_check_branch
      %60 = sbr.rel (0) target = $region21
    $region20: #{tpu_custom_call.1} parent=1 // pred_region
      %61 = dma.done [#allocation6], 256
    $region21: #{tpu_custom_call.1} parent=1 // pred_fallthru
      _
    // Predicated region
    $region22: #{tpu_custom_call.1} parent=1 // pred_check
      _
    $region23: #{tpu_custom_call.1} parent=1 // pred_check_branch
      %63 = sbr.rel (0) target = $region25
    $region24: #{tpu_custom_call.1} parent=1 // pred_region
      %64 = dma.done [#allocation9], 4096
    $region25: #{tpu_custom_call.1} parent=1 // pred_fallthru
      _
    // Predicated region
    $region26: #{tpu_custom_call.1} parent=1 // pred_check
      _
    $region27: #{tpu_custom_call.1} parent=1 // pred_check_branch
      %66 = sbr.rel (0) target = $region29
    $region28: #{tpu_custom_call.1} parent=1 // pred_region
      %67 = dma.done [#allocation9], 32
    $region29: #{tpu_custom_call.1} parent=1 // pred_fallthru
      _
    // Predicated region
    $region30: #{tpu_custom_call.1} parent=1 // pred_check
      _
    $region31: #{tpu_custom_call.1} parent=1 // pred_check_branch
      %69 = sbr.rel (0) target = $region33
    $region32: #{tpu_custom_call.1} parent=1 // pred_region
      %70 = dma.done [#allocation12], 256
    $region33: #{tpu_custom_call.1} parent=1 // pred_fallthru
      _
    %p71 = scmp.eq.s32.totalorder 0, 0
    // Predicated region
    $region34: #{tpu_custom_call.1} parent=1 // pred_check
      %p72 = pneg %p71
    $region35: #{tpu_custom_call.1} parent=1 // pred_check_branch
      %74 = sbr.rel (%p72) target = $region37
    $region36: #{tpu_custom_call.1} parent=1 // pred_region
      %vm75 = vcmask 7168
      %76 = vst.msk [vmem:[#allocation2] sm:$0xff] %vm75, -inf
      %77 = vst.msk [vmem:[#allocation2 + $0x8] sm:$0xff] %vm75, -inf
      %78 = vst.msk [vmem:[#allocation3] sm:$0xff] %vm75, 0.0
      %79 = vst.msk [vmem:[#allocation3 + $0x8] sm:$0xff] %vm75, 0.0
      %80 = vst.msk [vmem:[#allocation4] sm:$0xff] %vm75, 0.0
      %81 = vst.msk [vmem:[#allocation4 + $0x8] sm:$0xff] %vm75, 0.0
    $region37: #{tpu_custom_call.1} parent=1 // pred_fallthru
      _
    %v82 = vld [vmem:[#allocation5] sm:$0xff]
    %v83 = vld [vmem:[#allocation5 + $0x8] sm:$0xff]
    %v84 = vld [vmem:[#allocation8] sm:$0xff]
    %v85 = vld [vmem:[#allocation8 + $0x8] sm:$0xff]
    %v86 = vld [vmem:[#allocation8 + $0x10] sm:$0xff]
    %v87 = vld [vmem:[#allocation8 + $0x18] sm:$0xff]
    %v88 = vld [vmem:[#allocation8 + $0x20] sm:$0xff]
    %v89 = vld [vmem:[#allocation8 + $0x28] sm:$0xff]
    %v90 = vld [vmem:[#allocation8 + $0x30] sm:$0xff]
    %v91 = vld [vmem:[#allocation8 + $0x38] sm:$0xff]
    %v92 = vld [vmem:[#allocation8 + $0x40] sm:$0xff]
    %v93 = vld [vmem:[#allocation8 + $0x48] sm:$0xff]
    %v94 = vld [vmem:[#allocation8 + $0x50] sm:$0xff]
    %v95 = vld [vmem:[#allocation8 + $0x58] sm:$0xff]
    %v96 = vld [vmem:[#allocation8 + $0x60] sm:$0xff]
    %v97 = vld [vmem:[#allocation8 + $0x68] sm:$0xff]
    %v98 = vld [vmem:[#allocation8 + $0x70] sm:$0xff]
    %v99 = vld [vmem:[#allocation8 + $0x78] sm:$0xff]
    %v100 = vld [vmem:[#allocation8 + $0x80] sm:$0xff]
    %v101 = vld [vmem:[#allocation8 + $0x88] sm:$0xff]
    %v102 = vld [vmem:[#allocation8 + $0x90] sm:$0xff]
    %v103 = vld [vmem:[#allocation8 + $0x98] sm:$0xff]
    %v104 = vld [vmem:[#allocation8 + $0xa0] sm:$0xff]
    %v105 = vld [vmem:[#allocation8 + $0xa8] sm:$0xff]
    %v106 = vld [vmem:[#allocation8 + $0xb0] sm:$0xff]
    %v107 = vld [vmem:[#allocation8 + $0xb8] sm:$0xff]
    %v108 = vld [vmem:[#allocation8 + $0xc0] sm:$0xff]
    %v109 = vld [vmem:[#allocation8 + $0xc8] sm:$0xff]
    %v110 = vld [vmem:[#allocation8 + $0xd0] sm:$0xff]
    %v111 = vld [vmem:[#allocation8 + $0xd8] sm:$0xff]
    %v112 = vld [vmem:[#allocation8 + $0xe0] sm:$0xff]
    %v113 = vld [vmem:[#allocation8 + $0xe8] sm:$0xff]
    %v114 = vld [vmem:[#allocation8 + $0xf0] sm:$0xff]
    %v115 = vld [vmem:[#allocation8 + $0xf8] sm:$0xff]
    %v116 = vld [vmem:[#allocation10] sm:$0x3]
    %v118 = vlaneseq
    %v119 = vshrl.u32 %v118, 7
    %v120 = vsub.s32 0, %v119
    %v121 = vrot.slane %v116, %v120
    %v122 = vlaneseq
    %v123 = vshrl.u32 %v122, 7
    %v124 = vsub.s32 1, %v123
    %v125 = vrot.slane %v116, %v124
    %vm128 = vcmask 261120
    %v130 = vsel %vm128, %v82, 0
    %v133 = vsel %vm128, %v83, 0
    %v136 = vsel %vm128, %v84, 0
    %v139 = vsel %vm128, %v85, 0
    %v142 = vsel %vm128, %v86, 0
    %v145 = vsel %vm128, %v87, 0
    %v148 = vsel %vm128, %v88, 0
    %v151 = vsel %vm128, %v89, 0
    %v154 = vsel %vm128, %v90, 0
    %v157 = vsel %vm128, %v91, 0
    %v160 = vsel %vm128, %v92, 0
    %v163 = vsel %vm128, %v93, 0
    %v166 = vsel %vm128, %v94, 0
    %v169 = vsel %vm128, %v95, 0
    %v172 = vsel %vm128, %v96, 0
    %v175 = vsel %vm128, %v97, 0
    %v178 = vsel %vm128, %v98, 0
    %v181 = vsel %vm128, %v99, 0
    %v184 = vsel %vm128, %v100, 0
    %v187 = vsel %vm128, %v101, 0
    %v190 = vsel %vm128, %v102, 0
    %v193 = vsel %vm128, %v103, 0
    %v196 = vsel %vm128, %v104, 0
    %v199 = vsel %vm128, %v105, 0
    %v202 = vsel %vm128, %v106, 0
    %v205 = vsel %vm128, %v107, 0
    %v208 = vsel %vm128, %v108, 0
    %v211 = vsel %vm128, %v109, 0
    %v214 = vsel %vm128, %v110, 0
    %v217 = vsel %vm128, %v111, 0
    %v220 = vsel %vm128, %v112, 0
    %v223 = vsel %vm128, %v113, 0
    %v226 = vsel %vm128, %v114, 0
    %v229 = vsel %vm128, %v115, 0
    %231 = vmatprep.subr.mxu0 0.0
    %232 = vmatpush1.xpose.msra.mxu0 %v136
    %233 = vmatprep.subr.mxu0 0.0
    %234 = vmatpush1.xpose.msra.mxu0 %v139
    %235 = vmatprep.subr.mxu0 0.0
    %236 = vmatpush1.xpose.msra.mxu0 %v142
    %237 = vmatprep.subr.mxu0 0.0
    %238 = vmatpush1.xpose.msra.mxu0 %v145
    %239 = vmatprep.subr.mxu0 0.0
    %240 = vmatpush1.xpose.msra.mxu0 %v148
    %241 = vmatprep.subr.mxu0 0.0
    %242 = vmatpush1.xpose.msra.mxu0 %v151
    %243 = vmatprep.subr.mxu0 0.0
    %244 = vmatpush1.xpose.msra.mxu0 %v154
    %245 = vmatprep.subr.mxu0 0.0
    %246 = vmatpush1.xpose.msra.mxu0 %v157
    %247 = vmatprep.subr.mxu0 0.0
    %248 = vmatpush1.xpose.msra.mxu0 %v160
    %249 = vmatprep.subr.mxu0 0.0
    %250 = vmatpush1.xpose.msra.mxu0 %v163
    %251 = vmatprep.subr.mxu0 0.0
    %252 = vmatpush1.xpose.msra.mxu0 %v166
    %253 = vmatprep.subr.mxu0 0.0
    %254 = vmatpush1.xpose.msra.mxu0 %v169
    %255 = vmatprep.subr.mxu0 0.0
    %256 = vmatpush1.xpose.msra.mxu0 %v172
    %257 = vmatprep.subr.mxu0 0.0
    %258 = vmatpush1.xpose.msra.mxu0 %v175
    %259 = vmatprep.subr.mxu0 0.0
    %260 = vmatpush1.xpose.msra.mxu0 %v178
    %261 = vmatprep.subr.mxu0 0.0
    %262 = vmatpush1.xpose.msra.mxu0 %v181
    %263 = vmatprep.subr.mxu0 0.0
    %264 = vmatpush1.xpose.msra.mxu0 %v184
    %265 = vmatprep.subr.mxu0 0.0
    %266 = vmatpush1.xpose.msra.mxu0 %v187
    %267 = vmatprep.subr.mxu0 0.0
    %268 = vmatpush1.xpose.msra.mxu0 %v190
    %269 = vmatprep.subr.mxu0 0.0
    %270 = vmatpush1.xpose.msra.mxu0 %v193
    %271 = vmatprep.subr.mxu0 0.0
    %272 = vmatpush1.xpose.msra.mxu0 %v196
    %273 = vmatprep.subr.mxu0 0.0
    %274 = vmatpush1.xpose.msra.mxu0 %v199
    %275 = vmatprep.subr.mxu0 0.0
    %276 = vmatpush1.xpose.msra.mxu0 %v202
    %277 = vmatprep.subr.mxu0 0.0
    %278 = vmatpush1.xpose.msra.mxu0 %v205
    %279 = vmatprep.subr.mxu0 0.0
    %280 = vmatpush1.xpose.msra.mxu0 %v208
    %281 = vmatprep.subr.mxu0 0.0
    %282 = vmatpush1.xpose.msra.mxu0 %v211
    %283 = vmatprep.subr.mxu0 0.0
    %284 = vmatpush1.xpose.msra.mxu0 %v214
    %285 = vmatprep.subr.mxu0 0.0
    %286 = vmatpush1.xpose.msra.mxu0 %v217
    %287 = vmatprep.subr.mxu0 0.0
    %288 = vmatpush1.xpose.msra.mxu0 %v220
    %289 = vmatprep.subr.mxu0 0.0
    %290 = vmatpush1.xpose.msra.mxu0 %v223
    %291 = vmatprep.subr.mxu0 0.0
    %292 = vmatpush1.xpose.msra.mxu0 %v226
    %293 = vmatprep.subr.mxu0 0.0
    %294 = vmatpush1.xpose.msra.mxu0 %v229
    %295 = vmatprep.mubr.f32.mxu0 0.0
    %296 = vmatmul.mubr.f32.gmra.mrb[0].mxu0 %v130
    %v297 = vpop.f32.mrb[0].mxu0
    %v298 = vadd.f32 %v121, %v297
    %v299 = vpop.f32.mrb[0].mxu0
    %v300 = vadd.f32 %v125, %v299
    %301 = vmatprep.mubr.f32.mxu0 0.0
    %302 = vmatmul.mubr.f32.gmra.mrb[0].mxu0 %v133
    %v303 = vpop.f32.mrb[0].mxu0
    %v304 = vadd.f32 %v121, %v303
    %v305 = vpop.f32.mrb[0].mxu0
    %v306 = vadd.f32 %v125, %v305
    %307 = vdwg.mxu0
    %v308 = vld [vmem:[#allocation11] sm:$0xff]
    %v309 = vld [vmem:[#allocation11 + $0x8] sm:$0xff]
    %v310 = vlaneseq
    %v311 = vand.u32 %v310, 127
    %v312 = vadd.s32 %v311, 128
    %s313 = smul.u32 0, 256
    %v314 = vstv %s313
    %v315 = vsub.s32 %v308, %v314
    %v316 = vsub.s32 %v309, %v314
    %317 = vset.pattern.permute.xlu0 0
    %318 = vperm.xlu0 %317, %v315
    %v319 = vpop.permute.xlu0 %318
    %320 = vset.pattern.permute.xlu0 0
    %321 = vperm.xlu0 %320, %v316
    %v322 = vpop.permute.xlu0 %321
    %vm323 = vcmp.eq.s32.totalorder %v311, %v319
    %vm324 = vcmp.eq.s32.totalorder %v312, %v319
    %vm325 = vcmp.eq.s32.totalorder %v311, %v322
    %vm326 = vcmp.eq.s32.totalorder %v312, %v322
    %v327 = vld [vmem:[#allocation4] sm:$0xff]
    %v328 = vld [vmem:[#allocation4 + $0x8] sm:$0xff]
    %v329 = vsel %vm323, %v298, 0.0
    %v330 = vsel %vm324, %v300, 0.0
    %v331 = vsel %vm325, %v304, 0.0
    %v332 = vsel %vm326, %v306, 0.0
    %v333 = vadd.f32 %v329, %v330
    %334 = vadd.xlane.f32.xlu0 %v333
    %v335 = vpop.xlane.xlu0 %334
    %v336 = vadd.f32 %v331, %v332
    %337 = vadd.xlane.f32.xlu0 %v336
    %v338 = vpop.xlane.xlu0 %337
    %v339 = vadd.f32 %v327, %v335
    %v340 = vadd.f32 %v328, %v338
    %vm341 = vcmask 7168
    %342 = vst.msk [vmem:[#allocation4] sm:$0xff] %vm341, %v339
    %343 = vst.msk [vmem:[#allocation4 + $0x8] sm:$0xff] %vm341, %v340
    %v344 = vld [vmem:[#allocation2] sm:$0xff]
    %v345 = vld [vmem:[#allocation2 + $0x8] sm:$0xff]
    %v346 = vmax.f32 %v298, %v300
    %347 = vmax.xlane.f32.xlu0 %v346
    %v348 = vpop.xlane.xlu0 %347
    %v349 = vmax.f32 %v304, %v306
    %350 = vmax.xlane.f32.xlu0 %v349
    %v351 = vpop.xlane.xlu0 %350
    %v352 = vmax.f32 %v344, %v348
    %v353 = vmax.f32 %v345, %v351
    %v354 = vld [vmem:[#allocation3] sm:$0xff]
    %v355 = vld [vmem:[#allocation3 + $0x8] sm:$0xff]
    %v356 = vsub.f32 %v344, %v352
    %v357 = vsub.f32 %v345, %v353
    %v358 = vmul.f32 %v356, 1.442695
    %v359 = vpow.pop %v358
    %v360 = vmul.f32 %v357, 1.442695
    %v361 = vpow.pop %v360
    %v362 = vmul.f32 %v354, %v359
    %v363 = vmul.f32 %v355, %v361
    %365 = vset.pattern.permute.xlu0 0
    %366 = vperm.xlu0 %365, %v352
    %v367 = vpop.permute.xlu0 %366
    %370 = vset.pattern.permute.xlu0 0
    %371 = vperm.xlu0 %370, %v353
    %v372 = vpop.permute.xlu0 %371
    %v374 = vsub.f32 %v298, %v367
    %v375 = vsub.f32 %v300, %v367
    %v376 = vsub.f32 %v304, %v372
    %v377 = vsub.f32 %v306, %v372
    %v378 = vmul.f32 %v374, 1.442695
    %v379 = vpow.pop %v378
    %v380 = vmul.f32 %v375, 1.442695
    %v381 = vpow.pop %v380
    %v382 = vmul.f32 %v376, 1.442695
    %v383 = vpow.pop %v382
    %v384 = vmul.f32 %v377, 1.442695
    %v385 = vpow.pop %v384
    %v386 = vadd.f32 %v379, %v381
    %387 = vadd.xlane.f32.xlu0 %v386
    %v388 = vpop.xlane.xlu0 %387
    %v389 = vadd.f32 %v383, %v385
    %390 = vadd.xlane.f32.xlu0 %v389
    %v391 = vpop.xlane.xlu0 %390
    %v392 = vadd.f32 %v362, %v388
    %v393 = vadd.f32 %v363, %v391
    %394 = vst.msk [vmem:[#allocation3] sm:$0xff] %vm341, %v392
    %395 = vst.msk [vmem:[#allocation3 + $0x8] sm:$0xff] %vm341, %v393
    %396 = vst.msk [vmem:[#allocation2] sm:$0xff] %vm341, %v352
    %397 = vst.msk [vmem:[#allocation2 + $0x8] sm:$0xff] %vm341, %v353
    // Predicated region
    $region38: #{tpu_custom_call.1} parent=1 // pred_check
      %p398 = pneg %p71
    $region39: #{tpu_custom_call.1} parent=1 // pred_check_branch
      %400 = sbr.rel (%p398) target = $region41
    $region40: #{tpu_custom_call.1} parent=1 // pred_region
      %v401 = vld [vmem:[#allocation2] sm:$0xff]
      %v402 = vld [vmem:[#allocation2 + $0x8] sm:$0xff]
      %v403 = vld [vmem:[#allocation3] sm:$0xff]
      %v404 = vld [vmem:[#allocation3 + $0x8] sm:$0xff]
      %v405 = vlog2.pop %v403
      %v406 = vmul.f32 %v405, 0.6931472
      %v407 = vlog2.pop %v404
      %v408 = vmul.f32 %v407, 0.6931472
      %v409 = vadd.f32 %v401, %v406
      %v410 = vadd.f32 %v402, %v408
      %v411 = vld [vmem:[#allocation4] sm:$0xff]
      %v412 = vld [vmem:[#allocation4 + $0x8] sm:$0xff]
      %v413 = vsub.f32 %v409, %v411
      %v414 = vsub.f32 %v410, %v412
      %vm415 = vcmp.ne.s32.totalorder %v308, 4294967196
      %vm416 = vcmp.ne.s32.totalorder %v309, 4294967196
      %v417 = vsel %vm415, %v413, 0.0
      %v418 = vsel %vm416, %v414, 0.0
      %419 = vst.msk [vmem:[#allocation13] sm:$0xff] %vm341, %v417
      %420 = vst.msk [vmem:[#allocation13 + $0x8] sm:$0xff] %vm341, %v418
    $region41: #{tpu_custom_call.1} parent=1 // pred_fallthru
      _
    // Predicated region
    $region42: #{tpu_custom_call.1} parent=1 // pred_check
      _
    $region43: #{tpu_custom_call.1} parent=1 // pred_check_branch
      %422 = sbr.rel (0) target = $region45
    $region44: #{tpu_custom_call.1} parent=1 // pred_region
      %s424 = ssub.s32 256, 256
      %425 = vsyncadd [#allocation7], %s424
      %s426 = sshll.u32 [#allocation13], 4
      %s427 = int_to_ptr.vmem [resolvable:$true] %s426
      %432 = dma.vmem_to_hbm [thread:$0]  %s427, 256, %s4, [#allocation7], 128, 128, 8
    $region45: #{tpu_custom_call.1} parent=1 // pred_fallthru
      _
    // Predicated region
    $region46: #{tpu_custom_call.1} parent=1 // pred_check
      _
    $region47: #{tpu_custom_call.1} parent=1 // pred_check_branch
      %434 = sbr.rel (0) target = $region49
    $region48: #{tpu_custom_call.1} parent=1 // pred_region
      %435 = dma.done [#allocation7], 256
    $region49: #{tpu_custom_call.1} parent=1 // pred_fallthru
      _
    %436 = vsyncpa [#allocation6], 1
    %437 = vsyncpa [#allocation9], 1
    %438 = vsyncpa [#allocation12], 1
    %439 = vsyncpa [#allocation7], 1

</llo_original>
